<compile_context>
chip_gen: v7x
topology: tpu7x:2x2x1
jax: 0.10.0
libtpu: 0.0.40
codegen_flags: <defaults>
</compile_context>

<pallas_src>
import jax
import jax.numpy as jnp
import numpy as np
from jax import lax
from jax.experimental import pallas as pl
from jax.experimental.pallas import tpu as pltpu

EPS = 1e-5  # PyTorch InstanceNorm2d default eps


def make_bottleneck_kernel(K, Wp, L, off, residual):
    KK = K * K

    def inorm(h, inv_count_mask, gamma, beta):
        # h: (R, X); inv_count_mask: (1, X) holding 1/num_valid at valid pixels.
        mean = jnp.sum(h * inv_count_mask, axis=-1, keepdims=True)
        cen = h - mean                                     # reused for var + normalize
        var = jnp.sum(cen * cen * inv_count_mask, axis=-1, keepdims=True)
        scale = lax.rsqrt(var + EPS) * gamma               # folded on the (R, 1) stats
        return cen * scale + beta

    def kernel(x_ref, w1_ref, g1_ref, b1_ref, w2_ref, g2_ref, b2_ref,
               w3_ref, g3_ref, b3_ref, m1_ref, m2_ref, out_ref):
        x = x_ref[...].astype(jnp.float32)                 # (Bt*Cin, F), pixels on lanes
        m1 = m1_ref[...]                                   # (1, F)
        m2 = m2_ref[...]                                   # (1, L)

        # ---- conv1 (1x1) as one channel-mixing matmul -> IN1 -> relu6 ----
        h = jnp.dot(w1_ref[...], x, preferred_element_type=jnp.float32)
        h = jnp.clip(inorm(h, m1, g1_ref[...], b1_ref[...]), 0.0, 6.0)

        # ---- depthwise KxK conv: K*K contiguous shifted windows ----
        w2 = w2_ref[...]                                   # (Bt*Cmid, K*K), read once
        acc = h[:, 0:L] * w2[:, 0:1]                       # first tap initializes acc
        for t in range(1, KK):
            kh, kw = divmod(t, K)
            s = kh * Wp + kw
            acc = acc + h[:, s:s + L] * w2[:, t:t + 1]

        # ---- IN2 -> relu6 (stats over the valid, stride-decimated pixels) ----
        h2 = jnp.clip(inorm(acc, m2, g2_ref[...], b2_ref[...]), 0.0, 6.0)

        # ---- conv3 (1x1) -> IN3 (+ residual) ----
        o = jnp.dot(w3_ref[...], h2, preferred_element_type=jnp.float32)
        o = inorm(o, m2, g3_ref[...], b3_ref[...])
        if residual:
            o = o + x[:, off:off + L]
        out_ref[...] = o.astype(out_ref.dtype)

    return kernel


def bottleneck_forward(x, params, *, kernel_size, stride, block_batch=None):
    """Bottleneck forward. x: (N, Cin, H, W) NCHW, params in PyTorch shapes."""
    w1, g1, b1, w2, g2, b2, w3, g3, b3 = params
    N, Cin, H, W = x.shape
    K = kernel_size
    p = K // 2
    Cmid = w1.shape[0]
    Cout = w3.shape[0]
    assert stride in (1, 2), 'stride must be either 1 or 2'
    assert p <= H - 1 and p <= W - 1, 'reflection pad must be smaller than H, W'

    Hp, Wp = H + 2 * p, W + 2 * p
    Hf = Hp - K + 1                              # full-resolution depthwise row count
    Hout = (Hp - K) // stride + 1
    Wout = (Wp - K) // stride + 1
    residual = (stride == 1) and (Cin == Cout)
    if residual:
        assert (Hout, Wout) == (H, W), 'residual path requires an odd kernel_size'

    L = Hf * Wp                                  # wide (row-padded) output length
    F = -(-(Hp * Wp + K - 1) // 128) * 128       # lane-aligned padded input length
    off = p * Wp + p                             # residual: x(y,x) inside padded rows

    # ---- choose how many samples to fuse per grid step ----
    if block_batch is None:
        per_sample = 4 * ((Cin + Cmid) * F + (2 * Cmid + 2 * Cout) * L)
        budget = 4 << 20                         # conservative live-activation budget
        legal = [d for d in range(1, N + 1) if N % d == 0 and
                 (d == N or ((d * Cin) % 8 == 0 and (d * Cout) % 8 == 0))]
        fits = [d for d in legal if d * per_sample <= budget]
        block_batch = max(fits) if fits else min(legal)
    Bt = block_batch
    assert N % Bt == 0
    assert Bt == N or ((Bt * Cin) % 8 == 0 and (Bt * Cout) % 8 == 0), \
        'block rows must be sublane(8)-aligned unless the whole batch is one block'

    # ---- wrapper-side layout plumbing: reflection pad + flatten (lane-dense) ----
    xp = jnp.pad(x.astype(jnp.float32), ((0, 0), (0, 0), (p, p), (p, p)),
                 mode='reflect')
    x_flat = xp.reshape(N * Cin, Hp * Wp)
    x_flat = jnp.pad(x_flat, ((0, 0), (0, F - Hp * Wp)))

    w1m = jnp.kron(jnp.eye(Bt, dtype=jnp.float32), w1.reshape(Cmid, Cin))
    w3m = jnp.kron(jnp.eye(Bt, dtype=jnp.float32), w3.reshape(Cout, Cmid))
    w2m = jnp.tile(w2.reshape(Cmid, K * K), (Bt, 1))
    tile_col = lambda v: jnp.tile(v.reshape(-1), Bt).reshape(-1, 1).astype(jnp.float32)

    # 1/count masks over valid pixels (compile-time constants, built host-side).
    m1 = np.zeros((1, F), np.float32)
    for y in range(H):
        m1[0, (y + p) * Wp + p:(y + p) * Wp + p + W] = 1.0 / (H * W)
    m2 = np.zeros((1, L), np.float32)
    for yo in range(Hout):
        row0 = yo * stride * Wp
        m2[0, row0:row0 + Wout * stride:stride] = 1.0 / (Hout * Wout)
    m1 = jnp.asarray(m1)
    m2 = jnp.asarray(m2)

    kernel = make_bottleneck_kernel(K, Wp, L, off, residual)

    grid_spec = pltpu.PrefetchScalarGridSpec(
        num_scalar_prefetch=0,
        grid=(N // Bt,),
        in_specs=[
            pl.BlockSpec((Bt * Cin, F), lambda b: (b, 0)),          # x (padded, flat)
            pl.BlockSpec((Bt * Cmid, Bt * Cin), lambda b: (0, 0)),  # conv1 (block-diag)
            pl.BlockSpec((Bt * Cmid, 1), lambda b: (0, 0)),         # gamma1
            pl.BlockSpec((Bt * Cmid, 1), lambda b: (0, 0)),         # beta1
            pl.BlockSpec((Bt * Cmid, K * K), lambda b: (0, 0)),     # depthwise taps
            pl.BlockSpec((Bt * Cmid, 1), lambda b: (0, 0)),         # gamma2
            pl.BlockSpec((Bt * Cmid, 1), lambda b: (0, 0)),         # beta2
            pl.BlockSpec((Bt * Cout, Bt * Cmid), lambda b: (0, 0)), # conv3 (block-diag)
            pl.BlockSpec((Bt * Cout, 1), lambda b: (0, 0)),         # gamma3
            pl.BlockSpec((Bt * Cout, 1), lambda b: (0, 0)),         # beta3
            pl.BlockSpec((1, F), lambda b: (0, 0)),                 # IN1 1/count mask
            pl.BlockSpec((1, L), lambda b: (0, 0)),                 # IN2/IN3 1/count mask
        ],
        out_specs=pl.BlockSpec((Bt * Cout, L), lambda b: (b, 0)),
    )

    flops = 2 * N * (Cmid * Cin * F + Cmid * K * K * L + Cout * Cmid * L) \
        + 12 * N * (Cmid * F + (Cmid + Cout) * L)
    cost = pl.CostEstimate(
        flops=int(flops),
        transcendentals=int(N * (2 * Cmid + Cout)),
        bytes_accessed=int(4 * (N * Cin * F + N * Cout * L)),
    )

    out_wide = pl.pallas_call(
        kernel,
        out_shape=jax.ShapeDtypeStruct((N * Cout, L), jnp.float32),
        grid_spec=grid_spec,
        compiler_params=pltpu.CompilerParams(dimension_semantics=('parallel',)),
        cost_estimate=cost,
    )(x_flat, w1m, tile_col(g1), tile_col(b1), w2m, tile_col(g2), tile_col(b2),
      w3m, tile_col(g3), tile_col(b3), m1, m2)

    # Wide rows carry K-1 junk lanes at the right edge; slice out the valid,
    # stride-decimated output and restore NCHW (cheap XLA layout plumbing).
    out = out_wide.reshape(N, Cout, Hf, Wp)
    out = out[:, :, ::stride, ::stride][:, :, :Hout, :Wout]
    return out


def bottleneck_reference(x, params, *, kernel_size, stride):
    """Pure-JAX (XLA conv) reference with identical semantics, for testing."""
    w1, g1, b1, w2, g2, b2, w3, g3, b3 = params
    K = kernel_size
    p = K // 2
    Cmid = w1.shape[0]
    Cout = w3.shape[0]
    residual = (stride == 1) and (x.shape[1] == Cout)
    dn = ('NCHW', 'OIHW', 'NCHW')
    hi = lax.Precision.HIGHEST

    def inorm(h, g, b):
        mean = h.mean(axis=(2, 3), keepdims=True)
        var = ((h - mean) ** 2).mean(axis=(2, 3), keepdims=True)
        return (h - mean) * lax.rsqrt(var + EPS) * g.reshape(1, -1, 1, 1) \
            + b.reshape(1, -1, 1, 1)

    h = lax.conv_general_dilated(x, w1, (1, 1), 'VALID', dimension_numbers=dn,
                                 precision=hi)
    h = jnp.clip(inorm(h, g1, b1), 0.0, 6.0)
    h = jnp.pad(h, ((0, 0), (0, 0), (p, p), (p, p)), mode='reflect')
    h = lax.conv_general_dilated(h, w2, (stride, stride), 'VALID',
                                 dimension_numbers=dn, feature_group_count=Cmid,
                                 precision=hi)
    h = jnp.clip(inorm(h, g2, b2), 0.0, 6.0)
    o = lax.conv_general_dilated(h, w3, (1, 1), 'VALID', dimension_numbers=dn,
                                 precision=hi)
    o = inorm(o, g3, b3)
    if residual:
        o = x + o
    return o


def _make_params(key, Cin, Cmid, Cout, K):
    ks = jax.random.split(key, 9)
    w1 = 0.3 * jax.random.normal(ks[0], (Cmid, Cin, 1, 1), jnp.float32)
    g1 = 1.0 + 0.1 * jax.random.normal(ks[1], (Cmid,), jnp.float32)
    b1 = 0.1 * jax.random.normal(ks[2], (Cmid,), jnp.float32)
    w2 = 0.3 * jax.random.normal(ks[3], (Cmid, 1, K, K), jnp.float32)
    g2 = 1.0 + 0.1 * jax.random.normal(ks[4], (Cmid,), jnp.float32)
    b2 = 0.1 * jax.random.normal(ks[5], (Cmid,), jnp.float32)
    w3 = 0.3 * jax.random.normal(ks[6], (Cout, Cmid, 1, 1), jnp.float32)
    g3 = 1.0 + 0.1 * jax.random.normal(ks[7], (Cout,), jnp.float32)
    b3 = 0.1 * jax.random.normal(ks[8], (Cout,), jnp.float32)
    return (w1, g1, b1, w2, g2, b2, w3, g3, b3)


if __name__ == '__main__':
    root = jax.random.PRNGKey(0)

    configs = [
        # stride 1, inp_c == out_c -> residual path
        dict(N=2, inp_c=4, out_c=4, H=16, W=16, kernel_size=3, stride=1, t=2),
        # stride 2, different out_c -> strided, non-residual path
        dict(N=2, inp_c=4, out_c=6, H=16, W=16, kernel_size=3, stride=2, t=3),
    ]
    for i, cfg in enumerate(configs):
        kx, kp = jax.random.split(jax.random.fold_in(root, i))
        N, Cin, Cout = cfg['N'], cfg['inp_c'], cfg['out_c']
        Cmid = cfg['t'] * Cin
        K, stride = cfg['kernel_size'], cfg['stride']
        # NCHW input, exactly like the PyTorch module
        x = jax.random.normal(kx, (N, Cin, cfg['H'], cfg['W']), jnp.float32)
        params = _make_params(kp, Cin, Cmid, Cout, K)

        out = bottleneck_forward(x, params, kernel_size=K, stride=stride)
        out = jax.block_until_ready(out)
        ref = bottleneck_reference(x, params, kernel_size=K, stride=stride)
        assert out.shape == ref.shape, (out.shape, ref.shape)
        err = float(jnp.max(jnp.abs(out - ref)))
        assert err < 1e-3, f'config {i}: max abs err {err}'

    print('KERNEL_OK')
</pallas_src>

<mosaic_0001>
module attributes {stable_mosaic.version = 11 : i64} {
  func.func @kernel(%arg0: i32, %arg1: memref<8x384xf32, #tpu.memory_space<vmem>>, %arg2: memref<16x8xf32, #tpu.memory_space<vmem>>, %arg3: memref<16x1xf32, #tpu.memory_space<vmem>>, %arg4: memref<16x1xf32, #tpu.memory_space<vmem>>, %arg5: memref<16x9xf32, #tpu.memory_space<vmem>>, %arg6: memref<16x1xf32, #tpu.memory_space<vmem>>, %arg7: memref<16x1xf32, #tpu.memory_space<vmem>>, %arg8: memref<8x16xf32, #tpu.memory_space<vmem>>, %arg9: memref<8x1xf32, #tpu.memory_space<vmem>>, %arg10: memref<8x1xf32, #tpu.memory_space<vmem>>, %arg11: memref<1x384xf32, #tpu.memory_space<vmem>>, %arg12: memref<1x288xf32, #tpu.memory_space<vmem>>, %arg13: memref<8x288xf32, #tpu.memory_space<vmem>>) attributes {dimension_semantics = [#tpu.dimension_semantics<parallel>], iteration_bounds = array<i64: 1>, scalar_prefetch = 0 : i64, scratch_operands = 0 : i64, tpu.core_type = #tpu.core_type<tc>, window_params = [{transform_indices = @transform_0, window_bounds = array<i64: 8, 384>}, {pipeline_mode = #tpu.pipeline_mode<synchronous>, transform_indices = @transform_1, window_bounds = array<i64: 16, 8>}, {pipeline_mode = #tpu.pipeline_mode<synchronous>, transform_indices = @transform_2, window_bounds = array<i64: 16, 1>}, {pipeline_mode = #tpu.pipeline_mode<synchronous>, transform_indices = @transform_3, window_bounds = array<i64: 16, 1>}, {pipeline_mode = #tpu.pipeline_mode<synchronous>, transform_indices = @transform_4, window_bounds = array<i64: 16, 9>}, {pipeline_mode = #tpu.pipeline_mode<synchronous>, transform_indices = @transform_5, window_bounds = array<i64: 16, 1>}, {pipeline_mode = #tpu.pipeline_mode<synchronous>, transform_indices = @transform_6, window_bounds = array<i64: 16, 1>}, {pipeline_mode = #tpu.pipeline_mode<synchronous>, transform_indices = @transform_7, window_bounds = array<i64: 8, 16>}, {pipeline_mode = #tpu.pipeline_mode<synchronous>, transform_indices = @transform_8, window_bounds = array<i64: 8, 1>}, {pipeline_mode = #tpu.pipeline_mode<synchronous>, transform_indices = @transform_9, window_bounds = array<i64: 8, 1>}, {pipeline_mode = #tpu.pipeline_mode<synchronous>, transform_indices = @transform_10, window_bounds = array<i64: 1, 384>}, {pipeline_mode = #tpu.pipeline_mode<synchronous>, transform_indices = @transform_11, window_bounds = array<i64: 1, 288>}, {transform_indices = @transform_12, window_bounds = array<i64: 8, 288>}]} {
    %c0 = arith.constant 0 : index
    %c0_0 = arith.constant 0 : index
    %0 = vector.load %arg1[%c0, %c0_0] : memref<8x384xf32, #tpu.memory_space<vmem>>, vector<8x384xf32>
    %c0_1 = arith.constant 0 : index
    %c0_2 = arith.constant 0 : index
    %1 = vector.load %arg11[%c0_1, %c0_2] : memref<1x384xf32, #tpu.memory_space<vmem>>, vector<1x384xf32>
    %c0_3 = arith.constant 0 : index
    %c0_4 = arith.constant 0 : index
    %2 = vector.load %arg12[%c0_3, %c0_4] : memref<1x288xf32, #tpu.memory_space<vmem>>, vector<1x288xf32>
    %c0_5 = arith.constant 0 : index
    %c0_6 = arith.constant 0 : index
    %3 = vector.load %arg2[%c0_5, %c0_6] : memref<16x8xf32, #tpu.memory_space<vmem>>, vector<16x8xf32>
    %cst = arith.constant dense<0.000000e+00> : vector<16x384xf32>
    %4 = tpu.matmul %3, %0, %cst {dimension_numbers = #tpu.dot_dimension_numbers<[1], [0], [0], [1], [0, 0, 1, 1], [], []>} : vector<16x8xf32>, vector<8x384xf32>, vector<16x384xf32> -> vector<16x384xf32>
    %c0_7 = arith.constant 0 : index
    %c0_8 = arith.constant 0 : index
    %5 = vector.load %arg3[%c0_7, %c0_8] : memref<16x1xf32, #tpu.memory_space<vmem>>, vector<16x1xf32>
    %c0_9 = arith.constant 0 : index
    %c0_10 = arith.constant 0 : index
    %6 = vector.load %arg4[%c0_9, %c0_10] : memref<16x1xf32, #tpu.memory_space<vmem>>, vector<16x1xf32>
    %7 = vector.broadcast %1 : vector<1x384xf32> to vector<16x384xf32>
    %8 = arith.mulf %4, %7 : vector<16x384xf32>
    %cst_11 = arith.constant dense<0.000000e+00> : vector<16xf32>
    %9 = vector.multi_reduction <add>, %8, %cst_11 [1] : vector<16x384xf32> to vector<16xf32>
    %10 = vector.shape_cast %9 : vector<16xf32> to vector<16x1xf32>
    %11 = vector.broadcast %10 : vector<16x1xf32> to vector<16x384xf32>
    %12 = arith.subf %4, %11 : vector<16x384xf32>
    %13 = arith.mulf %12, %12 : vector<16x384xf32>
    %14 = vector.broadcast %1 : vector<1x384xf32> to vector<16x384xf32>
    %15 = arith.mulf %13, %14 : vector<16x384xf32>
    %cst_12 = arith.constant dense<0.000000e+00> : vector<16xf32>
    %16 = vector.multi_reduction <add>, %15, %cst_12 [1] : vector<16x384xf32> to vector<16xf32>
    %17 = vector.shape_cast %16 : vector<16xf32> to vector<16x1xf32>
    %cst_13 = arith.constant 9.99999974E-6 : f32
    %18 = vector.broadcast %cst_13 : f32 to vector<16x1xf32>
    %19 = arith.addf %17, %18 : vector<16x1xf32>
    %20 = math.rsqrt %19 : vector<16x1xf32>
    %21 = arith.mulf %20, %5 : vector<16x1xf32>
    %22 = vector.broadcast %21 : vector<16x1xf32> to vector<16x384xf32>
    %23 = arith.mulf %12, %22 : vector<16x384xf32>
    %24 = vector.broadcast %6 : vector<16x1xf32> to vector<16x384xf32>
    %25 = arith.addf %23, %24 : vector<16x384xf32>
    %cst_14 = arith.constant 0.000000e+00 : f32
    %cst_15 = arith.constant 6.000000e+00 : f32
    %26 = vector.broadcast %cst_14 : f32 to vector<16x384xf32>
    %27 = arith.maximumf %26, %25 : vector<16x384xf32>
    %28 = vector.broadcast %cst_15 : f32 to vector<16x384xf32>
    %29 = arith.minimumf %28, %27 : vector<16x384xf32>
    %c0_16 = arith.constant 0 : index
    %c0_17 = arith.constant 0 : index
    %30 = vector.load %arg5[%c0_16, %c0_17] : memref<16x9xf32, #tpu.memory_space<vmem>>, vector<16x9xf32>
    %31 = vector.extract_strided_slice %29 {offsets = [0, 0], sizes = [16, 288], strides = [1, 1]} : vector<16x384xf32> to vector<16x288xf32>
    %32 = vector.extract_strided_slice %30 {offsets = [0, 0], sizes = [16, 1], strides = [1, 1]} : vector<16x9xf32> to vector<16x1xf32>
    %33 = vector.broadcast %32 : vector<16x1xf32> to vector<16x288xf32>
    %34 = arith.mulf %31, %33 : vector<16x288xf32>
    %35 = vector.extract_strided_slice %29 {offsets = [0, 1], sizes = [16, 288], strides = [1, 1]} : vector<16x384xf32> to vector<16x288xf32>
    %36 = vector.extract_strided_slice %30 {offsets = [0, 1], sizes = [16, 1], strides = [1, 1]} : vector<16x9xf32> to vector<16x1xf32>
    %37 = vector.broadcast %36 : vector<16x1xf32> to vector<16x288xf32>
    %38 = arith.mulf %35, %37 : vector<16x288xf32>
    %39 = arith.addf %34, %38 : vector<16x288xf32>
    %40 = vector.extract_strided_slice %29 {offsets = [0, 2], sizes = [16, 288], strides = [1, 1]} : vector<16x384xf32> to vector<16x288xf32>
    %41 = vector.extract_strided_slice %30 {offsets = [0, 2], sizes = [16, 1], strides = [1, 1]} : vector<16x9xf32> to vector<16x1xf32>
    %42 = vector.broadcast %41 : vector<16x1xf32> to vector<16x288xf32>
    %43 = arith.mulf %40, %42 : vector<16x288xf32>
    %44 = arith.addf %39, %43 : vector<16x288xf32>
    %45 = vector.extract_strided_slice %29 {offsets = [0, 18], sizes = [16, 288], strides = [1, 1]} : vector<16x384xf32> to vector<16x288xf32>
    %46 = vector.extract_strided_slice %30 {offsets = [0, 3], sizes = [16, 1], strides = [1, 1]} : vector<16x9xf32> to vector<16x1xf32>
    %47 = vector.broadcast %46 : vector<16x1xf32> to vector<16x288xf32>
    %48 = arith.mulf %45, %47 : vector<16x288xf32>
    %49 = arith.addf %44, %48 : vector<16x288xf32>
    %50 = vector.extract_strided_slice %29 {offsets = [0, 19], sizes = [16, 288], strides = [1, 1]} : vector<16x384xf32> to vector<16x288xf32>
    %51 = vector.extract_strided_slice %30 {offsets = [0, 4], sizes = [16, 1], strides = [1, 1]} : vector<16x9xf32> to vector<16x1xf32>
    %52 = vector.broadcast %51 : vector<16x1xf32> to vector<16x288xf32>
    %53 = arith.mulf %50, %52 : vector<16x288xf32>
    %54 = arith.addf %49, %53 : vector<16x288xf32>
    %55 = vector.extract_strided_slice %29 {offsets = [0, 20], sizes = [16, 288], strides = [1, 1]} : vector<16x384xf32> to vector<16x288xf32>
    %56 = vector.extract_strided_slice %30 {offsets = [0, 5], sizes = [16, 1], strides = [1, 1]} : vector<16x9xf32> to vector<16x1xf32>
    %57 = vector.broadcast %56 : vector<16x1xf32> to vector<16x288xf32>
    %58 = arith.mulf %55, %57 : vector<16x288xf32>
    %59 = arith.addf %54, %58 : vector<16x288xf32>
    %60 = vector.extract_strided_slice %29 {offsets = [0, 36], sizes = [16, 288], strides = [1, 1]} : vector<16x384xf32> to vector<16x288xf32>
    %61 = vector.extract_strided_slice %30 {offsets = [0, 6], sizes = [16, 1], strides = [1, 1]} : vector<16x9xf32> to vector<16x1xf32>
    %62 = vector.broadcast %61 : vector<16x1xf32> to vector<16x288xf32>
    %63 = arith.mulf %60, %62 : vector<16x288xf32>
    %64 = arith.addf %59, %63 : vector<16x288xf32>
    %65 = vector.extract_strided_slice %29 {offsets = [0, 37], sizes = [16, 288], strides = [1, 1]} : vector<16x384xf32> to vector<16x288xf32>
    %66 = vector.extract_strided_slice %30 {offsets = [0, 7], sizes = [16, 1], strides = [1, 1]} : vector<16x9xf32> to vector<16x1xf32>
    %67 = vector.broadcast %66 : vector<16x1xf32> to vector<16x288xf32>
    %68 = arith.mulf %65, %67 : vector<16x288xf32>
    %69 = arith.addf %64, %68 : vector<16x288xf32>
    %70 = vector.extract_strided_slice %29 {offsets = [0, 38], sizes = [16, 288], strides = [1, 1]} : vector<16x384xf32> to vector<16x288xf32>
    %71 = vector.extract_strided_slice %30 {offsets = [0, 8], sizes = [16, 1], strides = [1, 1]} : vector<16x9xf32> to vector<16x1xf32>
    %72 = vector.broadcast %71 : vector<16x1xf32> to vector<16x288xf32>
    %73 = arith.mulf %70, %72 : vector<16x288xf32>
    %74 = arith.addf %69, %73 : vector<16x288xf32>
    %c0_18 = arith.constant 0 : index
    %c0_19 = arith.constant 0 : index
    %75 = vector.load %arg6[%c0_18, %c0_19] : memref<16x1xf32, #tpu.memory_space<vmem>>, vector<16x1xf32>
    %c0_20 = arith.constant 0 : index
    %c0_21 = arith.constant 0 : index
    %76 = vector.load %arg7[%c0_20, %c0_21] : memref<16x1xf32, #tpu.memory_space<vmem>>, vector<16x1xf32>
    %77 = vector.broadcast %2 : vector<1x288xf32> to vector<16x288xf32>
    %78 = arith.mulf %74, %77 : vector<16x288xf32>
    %cst_22 = arith.constant dense<0.000000e+00> : vector<16xf32>
    %79 = vector.multi_reduction <add>, %78, %cst_22 [1] : vector<16x288xf32> to vector<16xf32>
    %80 = vector.shape_cast %79 : vector<16xf32> to vector<16x1xf32>
    %81 = vector.broadcast %80 : vector<16x1xf32> to vector<16x288xf32>
    %82 = arith.subf %74, %81 : vector<16x288xf32>
    %83 = arith.mulf %82, %82 : vector<16x288xf32>
    %84 = vector.broadcast %2 : vector<1x288xf32> to vector<16x288xf32>
    %85 = arith.mulf %83, %84 : vector<16x288xf32>
    %cst_23 = arith.constant dense<0.000000e+00> : vector<16xf32>
    %86 = vector.multi_reduction <add>, %85, %cst_23 [1] : vector<16x288xf32> to vector<16xf32>
    %87 = vector.shape_cast %86 : vector<16xf32> to vector<16x1xf32>
    %cst_24 = arith.constant 9.99999974E-6 : f32
    %88 = vector.broadcast %cst_24 : f32 to vector<16x1xf32>
    %89 = arith.addf %87, %88 : vector<16x1xf32>
    %90 = math.rsqrt %89 : vector<16x1xf32>
    %91 = arith.mulf %90, %75 : vector<16x1xf32>
    %92 = vector.broadcast %91 : vector<16x1xf32> to vector<16x288xf32>
    %93 = arith.mulf %82, %92 : vector<16x288xf32>
    %94 = vector.broadcast %76 : vector<16x1xf32> to vector<16x288xf32>
    %95 = arith.addf %93, %94 : vector<16x288xf32>
    %cst_25 = arith.constant 0.000000e+00 : f32
    %cst_26 = arith.constant 6.000000e+00 : f32
    %96 = vector.broadcast %cst_25 : f32 to vector<16x288xf32>
    %97 = arith.maximumf %96, %95 : vector<16x288xf32>
    %98 = vector.broadcast %cst_26 : f32 to vector<16x288xf32>
    %99 = arith.minimumf %98, %97 : vector<16x288xf32>
    %c0_27 = arith.constant 0 : index
    %c0_28 = arith.constant 0 : index
    %100 = vector.load %arg8[%c0_27, %c0_28] : memref<8x16xf32, #tpu.memory_space<vmem>>, vector<8x16xf32>
    %cst_29 = arith.constant dense<0.000000e+00> : vector<8x288xf32>
    %101 = tpu.matmul %100, %99, %cst_29 {dimension_numbers = #tpu.dot_dimension_numbers<[1], [0], [0], [1], [0, 0, 1, 1], [], []>} : vector<8x16xf32>, vector<16x288xf32>, vector<8x288xf32> -> vector<8x288xf32>
    %c0_30 = arith.constant 0 : index
    %c0_31 = arith.constant 0 : index
    %102 = vector.load %arg9[%c0_30, %c0_31] : memref<8x1xf32, #tpu.memory_space<vmem>>, vector<8x1xf32>
    %c0_32 = arith.constant 0 : index
    %c0_33 = arith.constant 0 : index
    %103 = vector.load %arg10[%c0_32, %c0_33] : memref<8x1xf32, #tpu.memory_space<vmem>>, vector<8x1xf32>
    %104 = vector.broadcast %2 : vector<1x288xf32> to vector<8x288xf32>
    %105 = arith.mulf %101, %104 : vector<8x288xf32>
    %cst_34 = arith.constant dense<0.000000e+00> : vector<8xf32>
    %106 = vector.multi_reduction <add>, %105, %cst_34 [1] : vector<8x288xf32> to vector<8xf32>
    %107 = vector.shape_cast %106 : vector<8xf32> to vector<8x1xf32>
    %108 = vector.broadcast %107 : vector<8x1xf32> to vector<8x288xf32>
    %109 = arith.subf %101, %108 : vector<8x288xf32>
    %110 = arith.mulf %109, %109 : vector<8x288xf32>
    %111 = vector.broadcast %2 : vector<1x288xf32> to vector<8x288xf32>
    %112 = arith.mulf %110, %111 : vector<8x288xf32>
    %cst_35 = arith.constant dense<0.000000e+00> : vector<8xf32>
    %113 = vector.multi_reduction <add>, %112, %cst_35 [1] : vector<8x288xf32> to vector<8xf32>
    %114 = vector.shape_cast %113 : vector<8xf32> to vector<8x1xf32>
    %cst_36 = arith.constant 9.99999974E-6 : f32
    %115 = vector.broadcast %cst_36 : f32 to vector<8x1xf32>
    %116 = arith.addf %114, %115 : vector<8x1xf32>
    %117 = math.rsqrt %116 : vector<8x1xf32>
    %118 = arith.mulf %117, %102 : vector<8x1xf32>
    %119 = vector.broadcast %118 : vector<8x1xf32> to vector<8x288xf32>
    %120 = arith.mulf %109, %119 : vector<8x288xf32>
    %121 = vector.broadcast %103 : vector<8x1xf32> to vector<8x288xf32>
    %122 = arith.addf %120, %121 : vector<8x288xf32>
    %123 = vector.extract_strided_slice %0 {offsets = [0, 19], sizes = [8, 288], strides = [1, 1]} : vector<8x384xf32> to vector<8x288xf32>
    %124 = arith.addf %122, %123 : vector<8x288xf32>
    %c0_37 = arith.constant 0 : index
    %c0_38 = arith.constant 0 : index
    %125 = vector.load %arg13[%c0_37, %c0_38] : memref<8x288xf32, #tpu.memory_space<vmem>>, vector<8x288xf32>
    tpu.vector_store %arg13[%c0_37, %c0_38], %124 {strides = array<i32>} : memref<8x288xf32, #tpu.memory_space<vmem>>, vector<8x288xf32>,
    return
  }
  func.func @transform_0(%arg0: i32) -> (i32, i32) {
    %c0_i32 = arith.constant 0 : i32
    %c0_i32_0 = arith.constant 0 : i32
    return %arg0, %c0_i32 : i32, i32
  }
  func.func @transform_1(%arg0: i32) -> (i32, i32) {
    %c0_i32 = arith.constant 0 : i32
    %c0_i32_0 = arith.constant 0 : i32
    %c0_i32_1 = arith.constant 0 : i32
    return %c0_i32, %c0_i32_0 : i32, i32
  }
  func.func @transform_2(%arg0: i32) -> (i32, i32) {
    %c0_i32 = arith.constant 0 : i32
    %c0_i32_0 = arith.constant 0 : i32
    %c0_i32_1 = arith.constant 0 : i32
    return %c0_i32, %c0_i32_0 : i32, i32
  }
  func.func @transform_3(%arg0: i32) -> (i32, i32) {
    %c0_i32 = arith.constant 0 : i32
    %c0_i32_0 = arith.constant 0 : i32
    %c0_i32_1 = arith.constant 0 : i32
    return %c0_i32, %c0_i32_0 : i32, i32
  }
  func.func @transform_4(%arg0: i32) -> (i32, i32) {
    %c0_i32 = arith.constant 0 : i32
    %c0_i32_0 = arith.constant 0 : i32
    %c0_i32_1 = arith.constant 0 : i32
    return %c0_i32, %c0_i32_0 : i32, i32
  }
  func.func @transform_5(%arg0: i32) -> (i32, i32) {
    %c0_i32 = arith.constant 0 : i32
    %c0_i32_0 = arith.constant 0 : i32
    %c0_i32_1 = arith.constant 0 : i32
    return %c0_i32, %c0_i32_0 : i32, i32
  }
  func.func @transform_6(%arg0: i32) -> (i32, i32) {
    %c0_i32 = arith.constant 0 : i32
    %c0_i32_0 = arith.constant 0 : i32
    %c0_i32_1 = arith.constant 0 : i32
    return %c0_i32, %c0_i32_0 : i32, i32
  }
  func.func @transform_7(%arg0: i32) -> (i32, i32) {
    %c0_i32 = arith.constant 0 : i32
    %c0_i32_0 = arith.constant 0 : i32
    %c0_i32_1 = arith.constant 0 : i32
    return %c0_i32, %c0_i32_0 : i32, i32
  }
  func.func @transform_8(%arg0: i32) -> (i32, i32) {
    %c0_i32 = arith.constant 0 : i32
    %c0_i32_0 = arith.constant 0 : i32
    %c0_i32_1 = arith.constant 0 : i32
    return %c0_i32, %c0_i32_0 : i32, i32
  }
  func.func @transform_9(%arg0: i32) -> (i32, i32) {
    %c0_i32 = arith.constant 0 : i32
    %c0_i32_0 = arith.constant 0 : i32
    %c0_i32_1 = arith.constant 0 : i32
    return %c0_i32, %c0_i32_0 : i32, i32
  }
  func.func @transform_10(%arg0: i32) -> (i32, i32) {
    %c0_i32 = arith.constant 0 : i32
    %c0_i32_0 = arith.constant 0 : i32
    %c0_i32_1 = arith.constant 0 : i32
    return %c0_i32, %c0_i32_0 : i32, i32
  }
  func.func @transform_11(%arg0: i32) -> (i32, i32) {
    %c0_i32 = arith.constant 0 : i32
    %c0_i32_0 = arith.constant 0 : i32
    %c0_i32_1 = arith.constant 0 : i32
    return %c0_i32, %c0_i32_0 : i32, i32
  }
  func.func @transform_12(%arg0: i32) -> (i32, i32) {
    %c0_i32 = arith.constant 0 : i32
    %c0_i32_0 = arith.constant 0 : i32
    return %arg0, %c0_i32 : i32, i32
  }
}

</mosaic_0001>

<llo_original>
// kernel: tpu_custom_call.1
$region0: #{tpu_custom_call.1}
  #allocation0 [shape = 'u32[]', space=smem, size = 0x4, offset = 0x4, fixed_abs, tag = 'smem constant byte address 0x4 - core index']
  #allocation1 [shape = 'u32[144,128]{1,0:T(1,128)}', space=vmem, size = 0x12000, scoped, tag = 'internal scratch']
  %s0 = inlined_call_operand.vmem [shape: f32[8,384], index: 0, kind: input, shape index: {}]
  %s1 = inlined_call_operand.vmem [shape: f32[16,8], index: 1, kind: input, shape index: {}]
  %s2 = inlined_call_operand.vmem [shape: f32[16,1], index: 2, kind: input, shape index: {}]
  %s3 = inlined_call_operand.vmem [shape: f32[16,1], index: 3, kind: input, shape index: {}]
  %s4 = inlined_call_operand.vmem [shape: f32[16,9], index: 4, kind: input, shape index: {}]
  %s5 = inlined_call_operand.vmem [shape: f32[16,1], index: 5, kind: input, shape index: {}]
  %s6 = inlined_call_operand.vmem [shape: f32[16,1], index: 6, kind: input, shape index: {}]
  %s7 = inlined_call_operand.vmem [shape: f32[8,16], index: 7, kind: input, shape index: {}]
  %s8 = inlined_call_operand.vmem [shape: f32[8,1], index: 8, kind: input, shape index: {}]
  %s9 = inlined_call_operand.vmem [shape: f32[8,1], index: 9, kind: input, shape index: {}]
  %s10 = inlined_call_operand.vmem [shape: f32[1,384], index: 10, kind: input, shape index: {}]
  %s11 = inlined_call_operand.vmem [shape: f32[1,288], index: 11, kind: input, shape index: {}]
  %s12 = inlined_call_operand.hbm [shape: f32[8,288], index: 12, kind: output, shape index: {}]
  %s13 = sld [smem:[#allocation0]]
  $region58: #{tpu_custom_call.1} parent=0
    _
  %s15 = ssub.s32 1, %s13
  %s16 = scalar_select 0, %s15, %s13
  $region1: #{tpu_custom_call.1} parent=0
    #allocation2 [shape = 'u8[12288]{0}', space=vmem, size = 0x3000, scoped, tag = 'output window, operand 0, single buffered']
    #allocation3 [shape = 's32[1]{0}', space=sflag, size = 0x4, scoped, tag = 'scoped memory for tpu_custom_call.1']
    %17 = vsyncpa [#allocation3], 0
    // Predicated region
    $region2: #{tpu_custom_call.1} parent=1 // pred_check
      _
    $region3: #{tpu_custom_call.1} parent=1 // pred_check_branch
      %19 = sbr.rel (0) target = $region5
    $region4: #{tpu_custom_call.1} parent=1 // pred_region
      _
    $region5: #{tpu_custom_call.1} parent=1 // pred_fallthru
      _
    // Predicated region
    $region6: #{tpu_custom_call.1} parent=1 // pred_check
      _
    $region7: #{tpu_custom_call.1} parent=1 // pred_check_branch
      %21 = sbr.rel (0) target = $region9
    $region8: #{tpu_custom_call.1} parent=1 // pred_region
      _
    $region9: #{tpu_custom_call.1} parent=1 // pred_fallthru
      _
    // Predicated region
    $region10: #{tpu_custom_call.1} parent=1 // pred_check
      _
    $region11: #{tpu_custom_call.1} parent=1 // pred_check_branch
      %23 = sbr.rel (0) target = $region13
    $region12: #{tpu_custom_call.1} parent=1 // pred_region
      _
    $region13: #{tpu_custom_call.1} parent=1 // pred_fallthru
      _
    // Predicated region
    $region14: #{tpu_custom_call.1} parent=1 // pred_check
      _
    $region15: #{tpu_custom_call.1} parent=1 // pred_check_branch
      %25 = sbr.rel (0) target = $region17
    $region16: #{tpu_custom_call.1} parent=1 // pred_region
      _
    $region17: #{tpu_custom_call.1} parent=1 // pred_fallthru
      _
    // Predicated region
    $region18: #{tpu_custom_call.1} parent=1 // pred_check
      _
    $region19: #{tpu_custom_call.1} parent=1 // pred_check_branch
      %27 = sbr.rel (0) target = $region21
    $region20: #{tpu_custom_call.1} parent=1 // pred_region
      _
    $region21: #{tpu_custom_call.1} parent=1 // pred_fallthru
      _
    // Predicated region
    $region22: #{tpu_custom_call.1} parent=1 // pred_check
      _
    $region23: #{tpu_custom_call.1} parent=1 // pred_check_branch
      %29 = sbr.rel (0) target = $region25
    $region24: #{tpu_custom_call.1} parent=1 // pred_region
      _
    $region25: #{tpu_custom_call.1} parent=1 // pred_fallthru
      _
    // Predicated region
    $region26: #{tpu_custom_call.1} parent=1 // pred_check
      _
    $region27: #{tpu_custom_call.1} parent=1 // pred_check_branch
      %31 = sbr.rel (0) target = $region29
    $region28: #{tpu_custom_call.1} parent=1 // pred_region
      _
    $region29: #{tpu_custom_call.1} parent=1 // pred_fallthru
      _
    // Predicated region
    $region30: #{tpu_custom_call.1} parent=1 // pred_check
      _
    $region31: #{tpu_custom_call.1} parent=1 // pred_check_branch
      %33 = sbr.rel (0) target = $region33
    $region32: #{tpu_custom_call.1} parent=1 // pred_region
      _
    $region33: #{tpu_custom_call.1} parent=1 // pred_fallthru
      _
    // Predicated region
    $region34: #{tpu_custom_call.1} parent=1 // pred_check
      _
    $region35: #{tpu_custom_call.1} parent=1 // pred_check_branch
      %35 = sbr.rel (0) target = $region37
    $region36: #{tpu_custom_call.1} parent=1 // pred_region
      _
    $region37: #{tpu_custom_call.1} parent=1 // pred_fallthru
      _
    // Predicated region
    $region38: #{tpu_custom_call.1} parent=1 // pred_check
      _
    $region39: #{tpu_custom_call.1} parent=1 // pred_check_branch
      %37 = sbr.rel (0) target = $region41
    $region40: #{tpu_custom_call.1} parent=1 // pred_region
      _
    $region41: #{tpu_custom_call.1} parent=1 // pred_fallthru
      _
    // Predicated region
    $region42: #{tpu_custom_call.1} parent=1 // pred_check
      _
    $region43: #{tpu_custom_call.1} parent=1 // pred_check_branch
      %39 = sbr.rel (0) target = $region45
    $region44: #{tpu_custom_call.1} parent=1 // pred_region
      _
    $region45: #{tpu_custom_call.1} parent=1 // pred_fallthru
      _
    // Predicated region
    $region46: #{tpu_custom_call.1} parent=1 // pred_check
      _
    $region47: #{tpu_custom_call.1} parent=1 // pred_check_branch
      %41 = sbr.rel (0) target = $region49
    $region48: #{tpu_custom_call.1} parent=1 // pred_region
      _
    $region49: #{tpu_custom_call.1} parent=1 // pred_fallthru
      _
    %v42 = vld [vmem:[%s0] sm:$0xff]
    %v43 = vld [vmem:[%s0 + $0x8] sm:$0xff]
    %v44 = vld [vmem:[%s0 + $0x10] sm:$0xff]
    %v45 = vld [vmem:[%s10] sm:$0x7]
    %v46 = vld [vmem:[%s11] sm:$0x7]
    %v47 = vld [vmem:[%s1] sm:$0xff]
    %v48 = vld [vmem:[%s1 + $0x8] sm:$0xff]
    %vm49 = vcmask 64512
    %v51 = vsel %vm49, %v47, 0
    %v54 = vsel %vm49, %v48, 0
    %56 = vmatprep.subr.mxu0 %v43
    %57 = vmatpush1.msra.mxu0 %v42
    %58 = vmatprep.subr.mxu0 0.0
    %59 = vmatpush1.msra.mxu0 0.0
    %60 = vmatprep.subr.mxu0 0.0
    %61 = vmatpush1.msra.mxu0 0.0
    %62 = vmatprep.subr.mxu0 0.0
    %63 = vmatpush1.msra.mxu0 0.0
    %64 = vmatprep.subr.mxu0 0.0
    %65 = vmatpush1.msra.mxu0 0.0
    %66 = vmatprep.subr.mxu0 0.0
    %67 = vmatpush1.msra.mxu0 0.0
    %68 = vmatprep.subr.mxu0 0.0
    %69 = vmatpush1.msra.mxu0 0.0
    %70 = vmatprep.subr.mxu0 0.0
    %71 = vmatpush1.msra.mxu0 0.0
    %72 = vmatprep.subr.mxu0 0.0
    %73 = vmatpush1.msra.mxu0 0.0
    %74 = vmatprep.subr.mxu0 0.0
    %75 = vmatpush1.msra.mxu0 0.0
    %76 = vmatprep.subr.mxu0 0.0
    %77 = vmatpush1.msra.mxu0 0.0
    %78 = vmatprep.subr.mxu0 0.0
    %79 = vmatpush1.msra.mxu0 0.0
    %80 = vmatprep.subr.mxu0 0.0
    %81 = vmatpush1.msra.mxu0 0.0
    %82 = vmatprep.subr.mxu0 0.0
    %83 = vmatpush1.msra.mxu0 0.0
    %84 = vmatprep.subr.mxu0 0.0
    %85 = vmatpush1.msra.mxu0 0.0
    %86 = vmatprep.subr.mxu0 0.0
    %87 = vmatpush1.msra.mxu0 0.0
    %88 = vmatprep.subr.mxu0 0.0
    %89 = vmatpush1.msra.mxu0 0.0
    %90 = vmatprep.subr.mxu0 0.0
    %91 = vmatpush1.msra.mxu0 0.0
    %92 = vmatprep.subr.mxu0 0.0
    %93 = vmatpush1.msra.mxu0 0.0
    %94 = vmatprep.subr.mxu0 0.0
    %95 = vmatpush1.msra.mxu0 0.0
    %96 = vmatprep.subr.mxu0 0.0
    %97 = vmatpush1.msra.mxu0 0.0
    %98 = vmatprep.subr.mxu0 0.0
    %99 = vmatpush1.msra.mxu0 0.0
    %100 = vmatprep.subr.mxu0 0.0
    %101 = vmatpush1.msra.mxu0 0.0
    %102 = vmatprep.subr.mxu0 0.0
    %103 = vmatpush1.msra.mxu0 0.0
    %104 = vmatprep.subr.mxu0 0.0
    %105 = vmatpush1.msra.mxu0 0.0
    %106 = vmatprep.subr.mxu0 0.0
    %107 = vmatpush1.msra.mxu0 0.0
    %108 = vmatprep.subr.mxu0 0.0
    %109 = vmatpush1.msra.mxu0 0.0
    %110 = vmatprep.subr.mxu0 0.0
    %111 = vmatpush1.msra.mxu0 0.0
    %112 = vmatprep.subr.mxu0 0.0
    %113 = vmatpush1.msra.mxu0 0.0
    %114 = vmatprep.subr.mxu0 0.0
    %115 = vmatpush1.msra.mxu0 0.0
    %116 = vmatprep.subr.mxu0 0.0
    %117 = vmatpush1.msra.mxu0 0.0
    %118 = vmatprep.subr.mxu0 0.0
    %119 = vmatpush1.msra.mxu0 0.0
    %120 = vmatprep.mubr.f32.mxu0 0.0
    %121 = vmatmul.mubr.f32.gmra.mrb[0].mxu0 %v51
    %v122 = vpop.f32.mrb[0].mxu0
    %v123 = vadd.f32 0.0, %v122
    %v124 = vpop.f32.mrb[0].mxu0
    %v125 = vadd.f32 0.0, %v124
    %126 = vmatprep.mubr.f32.mxu0 0.0
    %127 = vmatmul.mubr.f32.gmra.mrb[0].mxu0 %v54
    %v128 = vpop.f32.mrb[0].mxu0
    %v129 = vadd.f32 0.0, %v128
    %v130 = vpop.f32.mrb[0].mxu0
    %v131 = vadd.f32 0.0, %v130
    %132 = vdwg.mxu0
    %133 = vmatprep.subr.mxu0 0.0
    %134 = vmatpush1.msra.mxu0 %v44
    %135 = vmatprep.subr.mxu0 0.0
    %136 = vmatpush1.msra.mxu0 0.0
    %137 = vmatprep.subr.mxu0 0.0
    %138 = vmatpush1.msra.mxu0 0.0
    %139 = vmatprep.subr.mxu0 0.0
    %140 = vmatpush1.msra.mxu0 0.0
    %141 = vmatprep.subr.mxu0 0.0
    %142 = vmatpush1.msra.mxu0 0.0
    %143 = vmatprep.subr.mxu0 0.0
    %144 = vmatpush1.msra.mxu0 0.0
    %145 = vmatprep.subr.mxu0 0.0
    %146 = vmatpush1.msra.mxu0 0.0
    %147 = vmatprep.subr.mxu0 0.0
    %148 = vmatpush1.msra.mxu0 0.0
    %149 = vmatprep.subr.mxu0 0.0
    %150 = vmatpush1.msra.mxu0 0.0
    %151 = vmatprep.subr.mxu0 0.0
    %152 = vmatpush1.msra.mxu0 0.0
    %153 = vmatprep.subr.mxu0 0.0
    %154 = vmatpush1.msra.mxu0 0.0
    %155 = vmatprep.subr.mxu0 0.0
    %156 = vmatpush1.msra.mxu0 0.0
    %157 = vmatprep.subr.mxu0 0.0
    %158 = vmatpush1.msra.mxu0 0.0
    %159 = vmatprep.subr.mxu0 0.0
    %160 = vmatpush1.msra.mxu0 0.0
    %161 = vmatprep.subr.mxu0 0.0
    %162 = vmatpush1.msra.mxu0 0.0
    %163 = vmatprep.subr.mxu0 0.0
    %164 = vmatpush1.msra.mxu0 0.0
    %165 = vmatprep.subr.mxu0 0.0
    %166 = vmatpush1.msra.mxu0 0.0
    %167 = vmatprep.subr.mxu0 0.0
    %168 = vmatpush1.msra.mxu0 0.0
    %169 = vmatprep.subr.mxu0 0.0
    %170 = vmatpush1.msra.mxu0 0.0
    %171 = vmatprep.subr.mxu0 0.0
    %172 = vmatpush1.msra.mxu0 0.0
    %173 = vmatprep.subr.mxu0 0.0
    %174 = vmatpush1.msra.mxu0 0.0
    %175 = vmatprep.subr.mxu0 0.0
    %176 = vmatpush1.msra.mxu0 0.0
    %177 = vmatprep.subr.mxu0 0.0
    %178 = vmatpush1.msra.mxu0 0.0
    %179 = vmatprep.subr.mxu0 0.0
    %180 = vmatpush1.msra.mxu0 0.0
    %181 = vmatprep.subr.mxu0 0.0
    %182 = vmatpush1.msra.mxu0 0.0
    %183 = vmatprep.subr.mxu0 0.0
    %184 = vmatpush1.msra.mxu0 0.0
    %185 = vmatprep.subr.mxu0 0.0
    %186 = vmatpush1.msra.mxu0 0.0
    %187 = vmatprep.subr.mxu0 0.0
    %188 = vmatpush1.msra.mxu0 0.0
    %189 = vmatprep.subr.mxu0 0.0
    %190 = vmatpush1.msra.mxu0 0.0
    %191 = vmatprep.subr.mxu0 0.0
    %192 = vmatpush1.msra.mxu0 0.0
    %193 = vmatprep.subr.mxu0 0.0
    %194 = vmatpush1.msra.mxu0 0.0
    %195 = vmatprep.subr.mxu0 0.0
    %196 = vmatpush1.msra.mxu0 0.0
    %197 = vmatprep.mubr.f32.mxu0 0.0
    %198 = vmatmul.mubr.f32.gmra.mrb[0].mxu0 %v51
    %v199 = vpop.f32.mrb[0].mxu0
    %v200 = vadd.f32 0.0, %v199
    %v201 = vpop.f32.mrb[0].mxu0
    %202 = vmatprep.mubr.f32.mxu0 0.0
    %203 = vmatmul.mubr.f32.gmra.mrb[0].mxu0 %v54
    %v204 = vpop.f32.mrb[0].mxu0
    %v205 = vadd.f32 0.0, %v204
    %v206 = vpop.f32.mrb[0].mxu0
    %207 = vdwg.mxu0
    %v208 = vld [vmem:[%s2] sm:$0xff]
    %v209 = vld [vmem:[%s2 + $0x8] sm:$0xff]
    %v210 = vld [vmem:[%s3] sm:$0xff]
    %v211 = vld [vmem:[%s3 + $0x8] sm:$0xff]
    %v213 = vlaneseq
    %v214 = vshrl.u32 %v213, 7
    %v215 = vsub.s32 0, %v214
    %v216 = vrot.slane %v45, %v215
    %v217 = vlaneseq
    %v218 = vshrl.u32 %v217, 7
    %v219 = vsub.s32 1, %v218
    %v220 = vrot.slane %v45, %v219
    %v221 = vlaneseq
    %v222 = vshrl.u32 %v221, 7
    %v223 = vsub.s32 2, %v222
    %v224 = vrot.slane %v45, %v223
    %v228 = vmul.f32 %v123, %v216
    %v229 = vmul.f32 %v125, %v220
    %v230 = vmul.f32 %v200, %v224
    %v231 = vmul.f32 %v129, %v216
    %v232 = vmul.f32 %v131, %v220
    %v233 = vmul.f32 %v205, %v224
    %v234 = vadd.f32 %v228, %v229
    %v235 = vadd.f32 %v234, %v230
    %236 = vadd.xlane.f32.xlu0 %v235
    %v237 = vpop.xlane.xlu0 %236
    %v238 = vadd.f32 %v231, %v232
    %v239 = vadd.f32 %v238, %v233
    %240 = vadd.xlane.f32.xlu0 %v239
    %v241 = vpop.xlane.xlu0 %240
    %v242 = vsub.f32 %v123, %v237
    %v243 = vsub.f32 %v125, %v237
    %v244 = vsub.f32 %v200, %v237
    %v245 = vsub.f32 %v129, %v241
    %v246 = vsub.f32 %v131, %v241
    %v247 = vsub.f32 %v205, %v241
    %v248 = vmul.f32 %v242, %v242
    %v249 = vmul.f32 %v243, %v243
    %v250 = vmul.f32 %v244, %v244
    %v251 = vmul.f32 %v245, %v245
    %v252 = vmul.f32 %v246, %v246
    %v253 = vmul.f32 %v247, %v247
    %v254 = vmul.f32 %v248, %v216
    %v255 = vmul.f32 %v249, %v220
    %v256 = vmul.f32 %v250, %v224
    %v257 = vmul.f32 %v251, %v216
    %v258 = vmul.f32 %v252, %v220
    %v259 = vmul.f32 %v253, %v224
    %v260 = vadd.f32 %v254, %v255
    %v261 = vadd.f32 %v260, %v256
    %262 = vadd.xlane.f32.xlu0 %v261
    %v263 = vpop.xlane.xlu0 %262
    %v264 = vadd.f32 %v257, %v258
    %v265 = vadd.f32 %v264, %v259
    %266 = vadd.xlane.f32.xlu0 %v265
    %v267 = vpop.xlane.xlu0 %266
    %v268 = vadd.f32 %v263, 1e-05
    %v269 = vadd.f32 %v267, 1e-05
    %v270 = vrsqrt.pop %v268
    %v271 = vrsqrt.pop %v269
    %v272 = vmul.f32 %v270, %v208
    %v273 = vmul.f32 %v271, %v209
    %275 = vset.pattern.permute.xlu0 0
    %276 = vperm.xlu0 %275, %v272
    %v277 = vpop.permute.xlu0 %276
    %280 = vset.pattern.permute.xlu0 0
    %281 = vperm.xlu0 %280, %v273
    %v282 = vpop.permute.xlu0 %281
    %v284 = vmul.f32 %v242, %v277
    %v285 = vmul.f32 %v243, %v277
    %v286 = vmul.f32 %v244, %v277
    %v287 = vmul.f32 %v245, %v282
    %v288 = vmul.f32 %v246, %v282
    %v289 = vmul.f32 %v247, %v282
    %291 = vset.pattern.permute.xlu0 0
    %292 = vperm.xlu0 %291, %v210
    %v293 = vpop.permute.xlu0 %292
    %296 = vset.pattern.permute.xlu0 0
    %297 = vperm.xlu0 %296, %v211
    %v298 = vpop.permute.xlu0 %297
    %v300 = vadd.f32 %v284, %v293
    %v301 = vadd.f32 %v285, %v293
    %v302 = vadd.f32 %v286, %v293
    %v303 = vadd.f32 %v287, %v298
    %v304 = vadd.f32 %v288, %v298
    %v305 = vadd.f32 %v289, %v298
    %v306 = vmax.f32 %v300, 0.0
    %v307 = vmax.f32 %v301, 0.0
    %v308 = vmax.f32 %v302, 0.0
    %v309 = vmax.f32 %v303, 0.0
    %v310 = vmax.f32 %v304, 0.0
    %v311 = vmax.f32 %v305, 0.0
    %v312 = vmin.f32 %v306, 6.0
    %v313 = vmin.f32 %v307, 6.0
    %v314 = vmin.f32 %v308, 6.0
    %v315 = vmin.f32 %v309, 6.0
    %v316 = vmin.f32 %v310, 6.0
    %v317 = vmin.f32 %v311, 6.0
    %v318 = vld [vmem:[%s4] sm:$0xff]
    %v319 = vld [vmem:[%s4 + $0x8] sm:$0xff]
    %321 = vset.pattern.permute.xlu0 0
    %322 = vperm.xlu0 %321, %v318
    %v323 = vpop.permute.xlu0 %322
    %326 = vset.pattern.permute.xlu0 0
    %327 = vperm.xlu0 %326, %v319
    %v328 = vpop.permute.xlu0 %327
    %v330 = vmul.f32 %v312, %v323
    %v331 = vmul.f32 %v313, %v323
    %v332 = vmul.f32 %v314, %v323
    %v333 = vmul.f32 %v315, %v328
    %v334 = vmul.f32 %v316, %v328
    %v335 = vmul.f32 %v317, %v328
    %336 = vset.pattern.permute.xlu0 1
    %337 = vperm.xlu0 %336, %v318
    %v338 = vpop.permute.xlu0 %337
    %340 = vset.pattern.permute.xlu0 1
    %341 = vperm.xlu0 %340, %v319
    %v342 = vpop.permute.xlu0 %341
    %v344 = vmul.f32 %v312, %v338
    %v345 = vmul.f32 %v313, %v338
    %v346 = vmul.f32 %v314, %v338
    %v347 = vmul.f32 %v315, %v342
    %v348 = vmul.f32 %v316, %v342
    %v349 = vmul.f32 %v317, %v342
    %356 = vrot.lane.b32.xlu0 %v344, 127
    %v357 = vpop.permute.xlu0 %356
    %358 = vrot.lane.b32.xlu0 %v345, 127
    %v359 = vpop.permute.xlu0 %358
    %360 = vrot.lane.b32.xlu0 %v346, 127
    %v361 = vpop.permute.xlu0 %360
    %362 = vrot.lane.b32.xlu0 %v347, 127
    %v363 = vpop.permute.xlu0 %362
    %364 = vrot.lane.b32.xlu0 %v348, 127
    %v365 = vpop.permute.xlu0 %364
    %366 = vrot.lane.b32.xlu0 %v349, 127
    %v367 = vpop.permute.xlu0 %366
    %vm368 = vcmask 1039360
    %v369 = vsel %vm368, %v357, %v359
    %v370 = vsel %vm368, %v359, %v361
    %v371 = vsel %vm368, %v363, %v365
    %v372 = vsel %vm368, %v365, %v367
    %v379 = vadd.f32 %v330, %v369
    %v380 = vadd.f32 %v331, %v370
    %v381 = vadd.f32 %v332, %v361
    %v382 = vadd.f32 %v333, %v371
    %v383 = vadd.f32 %v334, %v372
    %v384 = vadd.f32 %v335, %v367
    %385 = vset.pattern.permute.xlu0 2
    %386 = vperm.xlu0 %385, %v318
    %v387 = vpop.permute.xlu0 %386
    %389 = vset.pattern.permute.xlu0 2
    %390 = vperm.xlu0 %389, %v319
    %v391 = vpop.permute.xlu0 %390
    %v393 = vmul.f32 %v312, %v387
    %v394 = vmul.f32 %v313, %v387
    %v395 = vmul.f32 %v314, %v387
    %v396 = vmul.f32 %v315, %v391
    %v397 = vmul.f32 %v316, %v391
    %v398 = vmul.f32 %v317, %v391
    %405 = vrot.lane.b32.xlu0 %v393, 126
    %v406 = vpop.permute.xlu0 %405
    %407 = vrot.lane.b32.xlu0 %v394, 126
    %v408 = vpop.permute.xlu0 %407
    %409 = vrot.lane.b32.xlu0 %v395, 126
    %v410 = vpop.permute.xlu0 %409
    %411 = vrot.lane.b32.xlu0 %v396, 126
    %v412 = vpop.permute.xlu0 %411
    %413 = vrot.lane.b32.xlu0 %v397, 126
    %v414 = vpop.permute.xlu0 %413
    %415 = vrot.lane.b32.xlu0 %v398, 126
    %v416 = vpop.permute.xlu0 %415
    %vm417 = vcmask 1031168
    %v418 = vsel %vm417, %v406, %v408
    %v419 = vsel %vm417, %v408, %v410
    %v420 = vsel %vm417, %v412, %v414
    %v421 = vsel %vm417, %v414, %v416
    %v428 = vadd.f32 %v379, %v418
    %v429 = vadd.f32 %v380, %v419
    %v430 = vadd.f32 %v381, %v410
    %v431 = vadd.f32 %v382, %v420
    %v432 = vadd.f32 %v383, %v421
    %v433 = vadd.f32 %v384, %v416
    %434 = vset.pattern.permute.xlu0 3
    %435 = vperm.xlu0 %434, %v318
    %v436 = vpop.permute.xlu0 %435
    %438 = vset.pattern.permute.xlu0 3
    %439 = vperm.xlu0 %438, %v319
    %v440 = vpop.permute.xlu0 %439
    %v442 = vmul.f32 %v312, %v436
    %v443 = vmul.f32 %v313, %v436
    %v444 = vmul.f32 %v314, %v436
    %v445 = vmul.f32 %v315, %v440
    %v446 = vmul.f32 %v316, %v440
    %v447 = vmul.f32 %v317, %v440
    %454 = vrot.lane.b32.xlu0 %v442, 110
    %v455 = vpop.permute.xlu0 %454
    %456 = vrot.lane.b32.xlu0 %v443, 110
    %v457 = vpop.permute.xlu0 %456
    %458 = vrot.lane.b32.xlu0 %v444, 110
    %v459 = vpop.permute.xlu0 %458
    %460 = vrot.lane.b32.xlu0 %v445, 110
    %v461 = vpop.permute.xlu0 %460
    %462 = vrot.lane.b32.xlu0 %v446, 110
    %v463 = vpop.permute.xlu0 %462
    %464 = vrot.lane.b32.xlu0 %v447, 110
    %v465 = vpop.permute.xlu0 %464
    %vm466 = vcmask 900096
    %v467 = vsel %vm466, %v455, %v457
    %v468 = vsel %vm466, %v457, %v459
    %v469 = vsel %vm466, %v461, %v463
    %v470 = vsel %vm466, %v463, %v465
    %v477 = vadd.f32 %v428, %v467
    %v478 = vadd.f32 %v429, %v468
    %v479 = vadd.f32 %v430, %v459
    %v480 = vadd.f32 %v431, %v469
    %v481 = vadd.f32 %v432, %v470
    %v482 = vadd.f32 %v433, %v465
    %483 = vset.pattern.permute.xlu0 4
    %484 = vperm.xlu0 %483, %v318
    %v485 = vpop.permute.xlu0 %484
    %487 = vset.pattern.permute.xlu0 4
    %488 = vperm.xlu0 %487, %v319
    %v489 = vpop.permute.xlu0 %488
    %v491 = vmul.f32 %v312, %v485
    %v492 = vmul.f32 %v313, %v485
    %v493 = vmul.f32 %v314, %v485
    %v494 = vmul.f32 %v315, %v489
    %v495 = vmul.f32 %v316, %v489
    %v496 = vmul.f32 %v317, %v489
    %503 = vrot.lane.b32.xlu0 %v491, 109
    %v504 = vpop.permute.xlu0 %503
    %505 = vrot.lane.b32.xlu0 %v492, 109
    %v506 = vpop.permute.xlu0 %505
    %507 = vrot.lane.b32.xlu0 %v493, 109
    %v508 = vpop.permute.xlu0 %507
    %509 = vrot.lane.b32.xlu0 %v494, 109
    %v510 = vpop.permute.xlu0 %509
    %511 = vrot.lane.b32.xlu0 %v495, 109
    %v512 = vpop.permute.xlu0 %511
    %513 = vrot.lane.b32.xlu0 %v496, 109
    %v514 = vpop.permute.xlu0 %513
    %vm515 = vcmask 891904
    %v516 = vsel %vm515, %v504, %v506
    %v517 = vsel %vm515, %v506, %v508
    %v518 = vsel %vm515, %v510, %v512
    %v519 = vsel %vm515, %v512, %v514
    %v526 = vadd.f32 %v477, %v516
    %v527 = vadd.f32 %v478, %v517
    %v528 = vadd.f32 %v479, %v508
    %v529 = vadd.f32 %v480, %v518
    %v530 = vadd.f32 %v481, %v519
    %v531 = vadd.f32 %v482, %v514
    %532 = vset.pattern.permute.xlu0 5
    %533 = vperm.xlu0 %532, %v318
    %v534 = vpop.permute.xlu0 %533
    %536 = vset.pattern.permute.xlu0 5
    %537 = vperm.xlu0 %536, %v319
    %v538 = vpop.permute.xlu0 %537
    %v540 = vmul.f32 %v312, %v534
    %v541 = vmul.f32 %v313, %v534
    %v542 = vmul.f32 %v314, %v534
    %v543 = vmul.f32 %v315, %v538
    %v544 = vmul.f32 %v316, %v538
    %v545 = vmul.f32 %v317, %v538
    %552 = vrot.lane.b32.xlu0 %v540, 108
    %v553 = vpop.permute.xlu0 %552
    %554 = vrot.lane.b32.xlu0 %v541, 108
    %v555 = vpop.permute.xlu0 %554
    %556 = vrot.lane.b32.xlu0 %v542, 108
    %v557 = vpop.permute.xlu0 %556
    %558 = vrot.lane.b32.xlu0 %v543, 108
    %v559 = vpop.permute.xlu0 %558
    %560 = vrot.lane.b32.xlu0 %v544, 108
    %v561 = vpop.permute.xlu0 %560
    %562 = vrot.lane.b32.xlu0 %v545, 108
    %v563 = vpop.permute.xlu0 %562
    %vm564 = vcmask 883712
    %v565 = vsel %vm564, %v553, %v555
    %v566 = vsel %vm564, %v555, %v557
    %v567 = vsel %vm564, %v559, %v561
    %v568 = vsel %vm564, %v561, %v563
    %v575 = vadd.f32 %v526, %v565
    %v576 = vadd.f32 %v527, %v566
    %v577 = vadd.f32 %v528, %v557
    %v578 = vadd.f32 %v529, %v567
    %v579 = vadd.f32 %v530, %v568
    %v580 = vadd.f32 %v531, %v563
    %581 = vset.pattern.permute.xlu0 6
    %582 = vperm.xlu0 %581, %v318
    %v583 = vpop.permute.xlu0 %582
    %585 = vset.pattern.permute.xlu0 6
    %586 = vperm.xlu0 %585, %v319
    %v587 = vpop.permute.xlu0 %586
    %v589 = vmul.f32 %v312, %v583
    %v590 = vmul.f32 %v313, %v583
    %v591 = vmul.f32 %v314, %v583
    %v592 = vmul.f32 %v315, %v587
    %v593 = vmul.f32 %v316, %v587
    %v594 = vmul.f32 %v317, %v587
    %601 = vrot.lane.b32.xlu0 %v589, 92
    %v602 = vpop.permute.xlu0 %601
    %603 = vrot.lane.b32.xlu0 %v590, 92
    %v604 = vpop.permute.xlu0 %603
    %605 = vrot.lane.b32.xlu0 %v591, 92
    %v606 = vpop.permute.xlu0 %605
    %607 = vrot.lane.b32.xlu0 %v592, 92
    %v608 = vpop.permute.xlu0 %607
    %609 = vrot.lane.b32.xlu0 %v593, 92
    %v610 = vpop.permute.xlu0 %609
    %611 = vrot.lane.b32.xlu0 %v594, 92
    %v612 = vpop.permute.xlu0 %611
    %vm613 = vcmask 752640
    %v614 = vsel %vm613, %v602, %v604
    %v615 = vsel %vm613, %v604, %v606
    %v616 = vsel %vm613, %v608, %v610
    %v617 = vsel %vm613, %v610, %v612
    %v624 = vadd.f32 %v575, %v614
    %v625 = vadd.f32 %v576, %v615
    %v626 = vadd.f32 %v577, %v606
    %v627 = vadd.f32 %v578, %v616
    %v628 = vadd.f32 %v579, %v617
    %v629 = vadd.f32 %v580, %v612
    %630 = vset.pattern.permute.xlu0 7
    %631 = vperm.xlu0 %630, %v318
    %v632 = vpop.permute.xlu0 %631
    %634 = vset.pattern.permute.xlu0 7
    %635 = vperm.xlu0 %634, %v319
    %v636 = vpop.permute.xlu0 %635
    %v638 = vmul.f32 %v312, %v632
    %v639 = vmul.f32 %v313, %v632
    %v640 = vmul.f32 %v314, %v632
    %v641 = vmul.f32 %v315, %v636
    %v642 = vmul.f32 %v316, %v636
    %v643 = vmul.f32 %v317, %v636
    %650 = vrot.lane.b32.xlu0 %v638, 91
    %v651 = vpop.permute.xlu0 %650
    %652 = vrot.lane.b32.xlu0 %v639, 91
    %v653 = vpop.permute.xlu0 %652
    %654 = vrot.lane.b32.xlu0 %v640, 91
    %v655 = vpop.permute.xlu0 %654
    %656 = vrot.lane.b32.xlu0 %v641, 91
    %v657 = vpop.permute.xlu0 %656
    %658 = vrot.lane.b32.xlu0 %v642, 91
    %v659 = vpop.permute.xlu0 %658
    %660 = vrot.lane.b32.xlu0 %v643, 91
    %v661 = vpop.permute.xlu0 %660
    %vm662 = vcmask 744448
    %v663 = vsel %vm662, %v651, %v653
    %v664 = vsel %vm662, %v653, %v655
    %v665 = vsel %vm662, %v657, %v659
    %v666 = vsel %vm662, %v659, %v661
    %v673 = vadd.f32 %v624, %v663
    %v674 = vadd.f32 %v625, %v664
    %v675 = vadd.f32 %v626, %v655
    %v676 = vadd.f32 %v627, %v665
    %v677 = vadd.f32 %v628, %v666
    %v678 = vadd.f32 %v629, %v661
    %679 = vset.pattern.permute.xlu0 8
    %680 = vperm.xlu0 %679, %v318
    %v681 = vpop.permute.xlu0 %680
    %683 = vset.pattern.permute.xlu0 8
    %684 = vperm.xlu0 %683, %v319
    %v685 = vpop.permute.xlu0 %684
    %v687 = vmul.f32 %v312, %v681
    %v688 = vmul.f32 %v313, %v681
    %v689 = vmul.f32 %v314, %v681
    %v690 = vmul.f32 %v315, %v685
    %v691 = vmul.f32 %v316, %v685
    %v692 = vmul.f32 %v317, %v685
    %699 = vrot.lane.b32.xlu0 %v687, 90
    %v700 = vpop.permute.xlu0 %699
    %701 = vrot.lane.b32.xlu0 %v688, 90
    %v702 = vpop.permute.xlu0 %701
    %703 = vrot.lane.b32.xlu0 %v689, 90
    %v704 = vpop.permute.xlu0 %703
    %705 = vrot.lane.b32.xlu0 %v690, 90
    %v706 = vpop.permute.xlu0 %705
    %707 = vrot.lane.b32.xlu0 %v691, 90
    %v708 = vpop.permute.xlu0 %707
    %709 = vrot.lane.b32.xlu0 %v692, 90
    %v710 = vpop.permute.xlu0 %709
    %vm711 = vcmask 736256
    %v712 = vsel %vm711, %v700, %v702
    %v713 = vsel %vm711, %v702, %v704
    %v714 = vsel %vm711, %v706, %v708
    %v715 = vsel %vm711, %v708, %v710
    %v722 = vadd.f32 %v673, %v712
    %v723 = vadd.f32 %v674, %v713
    %v724 = vadd.f32 %v675, %v704
    %v725 = vadd.f32 %v676, %v714
    %v726 = vadd.f32 %v677, %v715
    %v727 = vadd.f32 %v678, %v710
    %v728 = vld [vmem:[%s5] sm:$0xff]
    %v729 = vld [vmem:[%s5 + $0x8] sm:$0xff]
    %v730 = vld [vmem:[%s6] sm:$0xff]
    %v731 = vld [vmem:[%s6 + $0x8] sm:$0xff]
    %v733 = vlaneseq
    %v734 = vshrl.u32 %v733, 7
    %v735 = vsub.s32 0, %v734
    %v736 = vrot.slane %v46, %v735
    %v737 = vlaneseq
    %v738 = vshrl.u32 %v737, 7
    %v739 = vsub.s32 1, %v738
    %v740 = vrot.slane %v46, %v739
    %v741 = vlaneseq
    %v742 = vshrl.u32 %v741, 7
    %v743 = vsub.s32 2, %v742
    %v744 = vrot.slane %v46, %v743
    %v748 = vmul.f32 %v722, %v736
    %v749 = vmul.f32 %v723, %v740
    %v750 = vmul.f32 %v724, %v744
    %v751 = vmul.f32 %v725, %v736
    %v752 = vmul.f32 %v726, %v740
    %v753 = vmul.f32 %v727, %v744
    %v754 = vadd.f32 %v748, %v749
    %vm755 = vcmask 261120
    %v756 = vsel %vm755, %v750, 0.0
    %v757 = vadd.f32 %v754, %v756
    %758 = vadd.xlane.f32.xlu0 %v757
    %v759 = vpop.xlane.xlu0 %758
    %v760 = vadd.f32 %v751, %v752
    %v761 = vsel %vm755, %v753, 0.0
    %v762 = vadd.f32 %v760, %v761
    %763 = vadd.xlane.f32.xlu0 %v762
    %v764 = vpop.xlane.xlu0 %763
    %v765 = vsub.f32 %v722, %v759
    %v766 = vsub.f32 %v723, %v759
    %v767 = vsub.f32 %v724, %v759
    %v768 = vsub.f32 %v725, %v764
    %v769 = vsub.f32 %v726, %v764
    %v770 = vsub.f32 %v727, %v764
    %v771 = vmul.f32 %v765, %v765
    %v772 = vmul.f32 %v766, %v766
    %v773 = vmul.f32 %v767, %v767
    %v774 = vmul.f32 %v768, %v768
    %v775 = vmul.f32 %v769, %v769
    %v776 = vmul.f32 %v770, %v770
    %v777 = vmul.f32 %v771, %v736
    %v778 = vmul.f32 %v772, %v740
    %v779 = vmul.f32 %v773, %v744
    %v780 = vmul.f32 %v774, %v736
    %v781 = vmul.f32 %v775, %v740
    %v782 = vmul.f32 %v776, %v744
    %v783 = vadd.f32 %v777, %v778
    %v784 = vsel %vm755, %v779, 0.0
    %v785 = vadd.f32 %v783, %v784
    %786 = vadd.xlane.f32.xlu0 %v785
    %v787 = vpop.xlane.xlu0 %786
    %v788 = vadd.f32 %v780, %v781
    %v789 = vsel %vm755, %v782, 0.0
    %v790 = vadd.f32 %v788, %v789
    %791 = vadd.xlane.f32.xlu0 %v790
    %v792 = vpop.xlane.xlu0 %791
    %v793 = vadd.f32 %v787, 1e-05
    %v794 = vadd.f32 %v792, 1e-05
    %v795 = vrsqrt.pop %v793
    %v796 = vrsqrt.pop %v794
    %v797 = vmul.f32 %v795, %v728
    %v798 = vmul.f32 %v796, %v729
    %800 = vset.pattern.permute.xlu0 0
    %801 = vperm.xlu0 %800, %v797
    %v802 = vpop.permute.xlu0 %801
    %805 = vset.pattern.permute.xlu0 0
    %806 = vperm.xlu0 %805, %v798
    %v807 = vpop.permute.xlu0 %806
    %v809 = vmul.f32 %v765, %v802
    %v810 = vmul.f32 %v766, %v802
    %v811 = vmul.f32 %v767, %v802
    %v812 = vmul.f32 %v768, %v807
    %v813 = vmul.f32 %v769, %v807
    %v814 = vmul.f32 %v770, %v807
    %816 = vset.pattern.permute.xlu0 0
    %817 = vperm.xlu0 %816, %v730
    %v818 = vpop.permute.xlu0 %817
    %821 = vset.pattern.permute.xlu0 0
    %822 = vperm.xlu0 %821, %v731
    %v823 = vpop.permute.xlu0 %822
    %v825 = vadd.f32 %v809, %v818
    %v826 = vadd.f32 %v810, %v818
    %v827 = vadd.f32 %v811, %v818
    %v828 = vadd.f32 %v812, %v823
    %v829 = vadd.f32 %v813, %v823
    %v830 = vadd.f32 %v814, %v823
    %v831 = vmax.f32 %v825, 0.0
    %v832 = vmax.f32 %v826, 0.0
    %v833 = vmax.f32 %v827, 0.0
    %v834 = vmax.f32 %v828, 0.0
    %v835 = vmax.f32 %v829, 0.0
    %v836 = vmax.f32 %v830, 0.0
    %v837 = vmin.f32 %v831, 6.0
    %v838 = vmin.f32 %v832, 6.0
    %v839 = vmin.f32 %v833, 6.0
    %v840 = vmin.f32 %v834, 6.0
    %v841 = vmin.f32 %v835, 6.0
    %v842 = vmin.f32 %v836, 6.0
    %v843 = vld [vmem:[%s7] sm:$0xff]
    %vm844 = vcmask 130048
    %v846 = vsel %vm844, %v843, 0
    %848 = vmatprep.subr.mxu0 %v838
    %849 = vmatpush1.msra.mxu0 %v837
    %850 = vmatprep.subr.mxu0 %v841
    %851 = vmatpush1.msra.mxu0 %v840
    %852 = vmatprep.subr.mxu0 0.0
    %853 = vmatpush1.msra.mxu0 0.0
    %854 = vmatprep.subr.mxu0 0.0
    %855 = vmatpush1.msra.mxu0 0.0
    %856 = vmatprep.subr.mxu0 0.0
    %857 = vmatpush1.msra.mxu0 0.0
    %858 = vmatprep.subr.mxu0 0.0
    %859 = vmatpush1.msra.mxu0 0.0
    %860 = vmatprep.subr.mxu0 0.0
    %861 = vmatpush1.msra.mxu0 0.0
    %862 = vmatprep.subr.mxu0 0.0
    %863 = vmatpush1.msra.mxu0 0.0
    %864 = vmatprep.subr.mxu0 0.0
    %865 = vmatpush1.msra.mxu0 0.0
    %866 = vmatprep.subr.mxu0 0.0
    %867 = vmatpush1.msra.mxu0 0.0
    %868 = vmatprep.subr.mxu0 0.0
    %869 = vmatpush1.msra.mxu0 0.0
    %870 = vmatprep.subr.mxu0 0.0
    %871 = vmatpush1.msra.mxu0 0.0
    %872 = vmatprep.subr.mxu0 0.0
    %873 = vmatpush1.msra.mxu0 0.0
    %874 = vmatprep.subr.mxu0 0.0
    %875 = vmatpush1.msra.mxu0 0.0
    %876 = vmatprep.subr.mxu0 0.0
    %877 = vmatpush1.msra.mxu0 0.0
    %878 = vmatprep.subr.mxu0 0.0
    %879 = vmatpush1.msra.mxu0 0.0
    %880 = vmatprep.subr.mxu0 0.0
    %881 = vmatpush1.msra.mxu0 0.0
    %882 = vmatprep.subr.mxu0 0.0
    %883 = vmatpush1.msra.mxu0 0.0
    %884 = vmatprep.subr.mxu0 0.0
    %885 = vmatpush1.msra.mxu0 0.0
    %886 = vmatprep.subr.mxu0 0.0
    %887 = vmatpush1.msra.mxu0 0.0
    %888 = vmatprep.subr.mxu0 0.0
    %889 = vmatpush1.msra.mxu0 0.0
    %890 = vmatprep.subr.mxu0 0.0
    %891 = vmatpush1.msra.mxu0 0.0
    %892 = vmatprep.subr.mxu0 0.0
    %893 = vmatpush1.msra.mxu0 0.0
    %894 = vmatprep.subr.mxu0 0.0
    %895 = vmatpush1.msra.mxu0 0.0
    %896 = vmatprep.subr.mxu0 0.0
    %897 = vmatpush1.msra.mxu0 0.0
    %898 = vmatprep.subr.mxu0 0.0
    %899 = vmatpush1.msra.mxu0 0.0
    %900 = vmatprep.subr.mxu0 0.0
    %901 = vmatpush1.msra.mxu0 0.0
    %902 = vmatprep.subr.mxu0 0.0
    %903 = vmatpush1.msra.mxu0 0.0
    %904 = vmatprep.subr.mxu0 0.0
    %905 = vmatpush1.msra.mxu0 0.0
    %906 = vmatprep.subr.mxu0 0.0
    %907 = vmatpush1.msra.mxu0 0.0
    %908 = vmatprep.subr.mxu0 0.0
    %909 = vmatpush1.msra.mxu0 0.0
    %910 = vmatprep.subr.mxu0 0.0
    %911 = vmatpush1.msra.mxu0 0.0
    %912 = vmatprep.mubr.f32.mxu0 0.0
    %913 = vmatmul.mubr.f32.gmra.mrb[0].mxu0 %v846
    %v914 = vpop.f32.mrb[0].mxu0
    %v915 = vadd.f32 0.0, %v914
    %v916 = vpop.f32.mrb[0].mxu0
    %v917 = vadd.f32 0.0, %v916
    %918 = vdwg.mxu0
    %919 = vmatprep.subr.mxu0 0.0
    %920 = vmatpush1.msra.mxu0 %v839
    %921 = vmatprep.subr.mxu0 0.0
    %922 = vmatpush1.msra.mxu0 %v842
    %923 = vmatprep.subr.mxu0 0.0
    %924 = vmatpush1.msra.mxu0 0.0
    %925 = vmatprep.subr.mxu0 0.0
    %926 = vmatpush1.msra.mxu0 0.0
    %927 = vmatprep.subr.mxu0 0.0
    %928 = vmatpush1.msra.mxu0 0.0
    %929 = vmatprep.subr.mxu0 0.0
    %930 = vmatpush1.msra.mxu0 0.0
    %931 = vmatprep.subr.mxu0 0.0
    %932 = vmatpush1.msra.mxu0 0.0
    %933 = vmatprep.subr.mxu0 0.0
    %934 = vmatpush1.msra.mxu0 0.0
    %935 = vmatprep.subr.mxu0 0.0
    %936 = vmatpush1.msra.mxu0 0.0
    %937 = vmatprep.subr.mxu0 0.0
    %938 = vmatpush1.msra.mxu0 0.0
    %939 = vmatprep.subr.mxu0 0.0
    %940 = vmatpush1.msra.mxu0 0.0
    %941 = vmatprep.subr.mxu0 0.0
    %942 = vmatpush1.msra.mxu0 0.0
    %943 = vmatprep.subr.mxu0 0.0
    %944 = vmatpush1.msra.mxu0 0.0
    %945 = vmatprep.subr.mxu0 0.0
    %946 = vmatpush1.msra.mxu0 0.0
    %947 = vmatprep.subr.mxu0 0.0
    %948 = vmatpush1.msra.mxu0 0.0
    %949 = vmatprep.subr.mxu0 0.0
    %950 = vmatpush1.msra.mxu0 0.0
    %951 = vmatprep.subr.mxu0 0.0
    %952 = vmatpush1.msra.mxu0 0.0
    %953 = vmatprep.subr.mxu0 0.0
    %954 = vmatpush1.msra.mxu0 0.0
    %955 = vmatprep.subr.mxu0 0.0
    %956 = vmatpush1.msra.mxu0 0.0
    %957 = vmatprep.subr.mxu0 0.0
    %958 = vmatpush1.msra.mxu0 0.0
    %959 = vmatprep.subr.mxu0 0.0
    %960 = vmatpush1.msra.mxu0 0.0
    %961 = vmatprep.subr.mxu0 0.0
    %962 = vmatpush1.msra.mxu0 0.0
    %963 = vmatprep.subr.mxu0 0.0
    %964 = vmatpush1.msra.mxu0 0.0
    %965 = vmatprep.subr.mxu0 0.0
    %966 = vmatpush1.msra.mxu0 0.0
    %967 = vmatprep.subr.mxu0 0.0
    %968 = vmatpush1.msra.mxu0 0.0
    %969 = vmatprep.subr.mxu0 0.0
    %970 = vmatpush1.msra.mxu0 0.0
    %971 = vmatprep.subr.mxu0 0.0
    %972 = vmatpush1.msra.mxu0 0.0
    %973 = vmatprep.subr.mxu0 0.0
    %974 = vmatpush1.msra.mxu0 0.0
    %975 = vmatprep.subr.mxu0 0.0
    %976 = vmatpush1.msra.mxu0 0.0
    %977 = vmatprep.subr.mxu0 0.0
    %978 = vmatpush1.msra.mxu0 0.0
    %979 = vmatprep.subr.mxu0 0.0
    %980 = vmatpush1.msra.mxu0 0.0
    %981 = vmatprep.subr.mxu0 0.0
    %982 = vmatpush1.msra.mxu0 0.0
    %983 = vmatprep.mubr.f32.mxu0 0.0
    %984 = vmatmul.mubr.f32.gmra.mrb[0].mxu0 %v846
    %v985 = vpop.f32.mrb[0].mxu0
    %v986 = vadd.f32 0.0, %v985
    %v987 = vpop.f32.mrb[0].mxu0
    %988 = vdwg.mxu0
    %v989 = vld [vmem:[%s8] sm:$0xff]
    %v990 = vld [vmem:[%s9] sm:$0xff]
    %v991 = vmul.f32 %v915, %v736
    %v992 = vmul.f32 %v917, %v740
    %v993 = vmul.f32 %v986, %v744
    %v994 = vadd.f32 %v991, %v992
    %v995 = vsel %vm755, %v993, 0.0
    %v996 = vadd.f32 %v994, %v995
    %997 = vadd.xlane.f32.xlu0 %v996
    %v998 = vpop.xlane.xlu0 %997
    %v999 = vsub.f32 %v915, %v998
    %v1000 = vsub.f32 %v917, %v998
    %v1001 = vsub.f32 %v986, %v998
    %v1002 = vmul.f32 %v999, %v999
    %v1003 = vmul.f32 %v1000, %v1000
    %v1004 = vmul.f32 %v1001, %v1001
    %v1005 = vmul.f32 %v1002, %v736
    %v1006 = vmul.f32 %v1003, %v740
    %v1007 = vmul.f32 %v1004, %v744
    %v1008 = vadd.f32 %v1005, %v1006
    %v1009 = vsel %vm755, %v1007, 0.0
    %v1010 = vadd.f32 %v1008, %v1009
    %1011 = vadd.xlane.f32.xlu0 %v1010
    %v1012 = vpop.xlane.xlu0 %1011
    %v1013 = vadd.f32 %v1012, 1e-05
    %v1014 = vrsqrt.pop %v1013
    %v1015 = vmul.f32 %v1014, %v989
    %1017 = vset.pattern.permute.xlu0 0
    %1018 = vperm.xlu0 %1017, %v1015
    %v1019 = vpop.permute.xlu0 %1018
    %v1021 = vmul.f32 %v999, %v1019
    %v1022 = vmul.f32 %v1000, %v1019
    %v1023 = vmul.f32 %v1001, %v1019
    %1025 = vset.pattern.permute.xlu0 0
    %1026 = vperm.xlu0 %1025, %v990
    %v1027 = vpop.permute.xlu0 %1026
    %v1029 = vadd.f32 %v1021, %v1027
    %v1030 = vadd.f32 %v1022, %v1027
    %v1031 = vadd.f32 %v1023, %v1027
    %1035 = vrot.lane.b32.xlu0 %v42, 109
    %v1036 = vpop.permute.xlu0 %1035
    %1037 = vrot.lane.b32.xlu0 %v43, 109
    %v1038 = vpop.permute.xlu0 %1037
    %1039 = vrot.lane.b32.xlu0 %v44, 109
    %v1040 = vpop.permute.xlu0 %1039
    %v1041 = vsel %vm515, %v1036, %v1038
    %v1042 = vsel %vm515, %v1038, %v1040
    %v1046 = vadd.f32 %v1029, %v1041
    %v1047 = vadd.f32 %v1030, %v1042
    %v1048 = vadd.f32 %v1031, %v1040
    %1049 = vst [vmem:[#allocation2] sm:$0xff] %v1046
    %1050 = vst [vmem:[#allocation2 + $0x8] sm:$0xff] %v1047
    %1051 = vst.msk [vmem:[#allocation2 + $0x10] sm:$0xff] %vm755, %v1048
    // Predicated region
    $region50: #{tpu_custom_call.1} parent=1 // pred_check
      _
    $region51: #{tpu_custom_call.1} parent=1 // pred_check_branch
      %1053 = sbr.rel (0) target = $region53
    $region52: #{tpu_custom_call.1} parent=1 // pred_region
      %s1055 = ssub.s32 384, 384
      %1056 = vsyncadd [#allocation3], %s1055
      %s1058 = sshll.u32 [#allocation2], 4
      %s1059 = int_to_ptr.vmem [resolvable:$true] %s1058
      %1061 = dma.vmem_to_hbm [thread:$0]  %s1059, 384, %s12, [#allocation3]
    $region53: #{tpu_custom_call.1} parent=1 // pred_fallthru
      _
    // Predicated region
    $region54: #{tpu_custom_call.1} parent=1 // pred_check
      _
    $region55: #{tpu_custom_call.1} parent=1 // pred_check_branch
      %1063 = sbr.rel (0) target = $region57
    $region56: #{tpu_custom_call.1} parent=1 // pred_region
      %1064 = dma.done [#allocation3], 384
    $region57: #{tpu_custom_call.1} parent=1 // pred_fallthru
      _
    %1065 = vsyncpa [#allocation3], 1

</llo_original>
